<compile_context>
chip_gen: v7x
topology: tpu7x:2x2x1
jax: 0.10.0
libtpu: 0.0.40
codegen_flags: <defaults>
</compile_context>

<pallas_src>
import jax
import jax.numpy as jnp
from jax.experimental import pallas as pl
from jax.experimental.pallas import tpu as pltpu

SELU_ALPHA = 1.6732632423543772
SELU_SCALE = 1.0507009873554805

_MIB = 1024 * 1024
_WEIGHT_SINGLE_BUFFER_BYTES = 4 * _MIB   # single-buffer the resident weight past this
_MAX_BATCH_TILE = 4096                   # rows; amortizes per-grid-step overhead
_MIN_GRID_STEPS = 8                      # keep both v7x TCs fed + pipeline depth


def _round_up(x, m):
    return ((x + m - 1) // m) * m


def _selu(x):
    # f32 elementwise on the VPU; exp rides the EUP slot under the MXU work.
    return SELU_SCALE * jnp.where(x > 0, x, SELU_ALPHA * (jnp.exp(x) - 1.0))


def _resblock_kernel(x_ref, w_ref, b_ref, o_ref):
    """One (TB, W) batch tile.

    w_ref: grid-resident (in, out) weight already in the MXU compute dtype.
    b_ref: grid-resident (1, W) f32 bias.
    """
    x = x_ref[...]                      # (TB, W), input dtype
    w = w_ref[...]                      # (W, W), compute dtype, (in, out) layout
    b = b_ref[...]                      # (1, W), f32
    x_f32 = x.astype(jnp.float32)

    h = jnp.dot(x.astype(w.dtype), w, preferred_element_type=jnp.float32)
    h = _selu(h + b)
    h2 = jnp.dot(h.astype(w.dtype), w, preferred_element_type=jnp.float32)
    o_ref[...] = _selu(h2 + b + x_f32).astype(o_ref.dtype)


def _vmem_limits():
    """Returns (vmem_limit_bytes, tile_budget_bytes), per TPU generation.

    ~half of physical VMEM plus slack, never above what fits v7x's 64 MiB part;
    falls back to a v7x-safe assumption if the hardware query is unavailable.
    """
    try:
        phys = pltpu.get_tpu_info().vmem_capacity_bytes
    except Exception:  # pragma: no cover - robustness against API/field changes
        phys = 64 * _MIB                # v7x has the smallest VMEM; assume it
    limit = min(phys // 2 + 16 * _MIB, 64 * _MIB)
    return limit, limit - 8 * _MIB


def prepare_resblock_params(weight, bias, compute_dtype=jnp.bfloat16):
    """One-time parameter prep (do NOT pay this per call).

    Transposes PyTorch's (out, in) weight to (in, out) so the kernel does a
    straight x @ w feed to the MXU, and pre-casts it to the compute dtype.
    Bias stays f32 for the epilogue.
    """
    W = weight.shape[0]
    assert weight.shape == (W, W) and bias.shape == (W,)
    w_t = jnp.asarray(weight).T.astype(compute_dtype)
    b2 = jnp.asarray(bias).reshape(1, W).astype(jnp.float32)
    return w_t, b2


def _pick_batch_tile(batch, w, x_itemsize, cd_itemsize, weight_bufs, budget_bytes):
    """Largest power-of-two batch tile fitting the VMEM budget, with at least
    _MIN_GRID_STEPS grid steps when the batch allows it."""
    fixed = weight_bufs * w * w * cd_itemsize + 2 * w * 4   # resident weight + bias
    if fixed > budget_bytes:
        # TODO(synk): add an N-/K-tiled weight path (grid=(batch_tiles, n_tiles))
        # for widths whose resident weight alone exceeds the VMEM budget.
        raise NotImplementedError(
            f"ResBlock width {w}: resident weight ({fixed / _MIB:.1f} MiB) exceeds "
            f"the VMEM budget ({budget_bytes / _MIB:.1f} MiB)")
    # Per-row VMEM: double-buffered in + out tiles, in-kernel f32 intermediates
    # (x_f32, h/h2, epilogue temps) and the compute-dtype casts of x and h.
    per_row = w * (4 * x_itemsize + 4 * 4 + 2 * cd_itemsize)
    tb = _MAX_BATCH_TILE
    while tb > 8 and fixed + tb * per_row > budget_bytes:
        tb //= 2
    # Keep >= _MIN_GRID_STEPS grid steps (megacore split + pipeline depth).
    tb = min(tb, max(8, _round_up(pl.cdiv(batch, _MIN_GRID_STEPS), 8)))
    # Never larger than the (8-row padded) batch itself.
    tb = min(tb, _round_up(batch, 8))
    return max(tb, 8)


def resblock_apply(x, w_prepped, b_prepped, *, block_b=None):
    """x: (B, W); w_prepped: (W, W) in (in, out) layout / compute dtype;
    b_prepped: (1, W) f32."""
    B, W = x.shape
    assert w_prepped.shape == (W, W) and b_prepped.shape == (1, W)

    vmem_limit, budget = _vmem_limits()
    cd_itemsize = jnp.dtype(w_prepped.dtype).itemsize
    weight_bytes = W * W * cd_itemsize
    single_buffer_weight = weight_bytes >= _WEIGHT_SINGLE_BUFFER_BYTES
    weight_bufs = 1 if single_buffer_weight else 2

    tb = block_b if block_b is not None else _pick_batch_tile(
        B, W, jnp.dtype(x.dtype).itemsize, cd_itemsize, weight_bufs, budget)
    grid = (pl.cdiv(B, tb),)

    # Weight / bias have a constant index_map => DMA'd once, resident across all
    # batch tiles.  Large weights are single-buffered so default double-buffering
    # doesn't double the resident footprint (matters most on v7x's 64 MiB VMEM).
    if single_buffer_weight:
        w_spec = pl.BlockSpec((W, W), lambda i: (0, 0), pipeline_mode=pl.Buffered(1))
        b_spec = pl.BlockSpec((1, W), lambda i: (0, 0), pipeline_mode=pl.Buffered(1))
    else:
        w_spec = pl.BlockSpec((W, W), lambda i: (0, 0))
        b_spec = pl.BlockSpec((1, W), lambda i: (0, 0))

    return pl.pallas_call(
        _resblock_kernel,
        out_shape=jax.ShapeDtypeStruct((B, W), x.dtype),
        grid_spec=pltpu.PrefetchScalarGridSpec(
            num_scalar_prefetch=0,
            grid=grid,
            in_specs=[
                pl.BlockSpec((tb, W), lambda i: (i, 0)),   # x: batch-tiled, unpadded
                w_spec,                                    # weight: resident
                b_spec,                                    # bias: resident
            ],
            out_specs=pl.BlockSpec((tb, W), lambda i: (i, 0)),
        ),
        compiler_params=pltpu.CompilerParams(
            dimension_semantics=("parallel",),             # batch tiles independent
            vmem_limit_bytes=int(vmem_limit)),
    )(x, w_prepped, b_prepped)


def resblock_forward(x, weight, bias, *, compute_dtype=jnp.bfloat16, block_b=None):
    """Convenience wrapper: PyTorch-layout params in, prepared once per call."""
    w_p, b_p = prepare_resblock_params(weight, bias, compute_dtype)
    return resblock_apply(x, w_p, b_p, block_b=block_b)


def resblock_reference(x, weight, bias):
    def lin(v):
        return v @ weight.T + bias
    return _selu(lin(_selu(lin(x))) + x)


if __name__ == "__main__":
    key = jax.random.PRNGKey(0)
    k_x, k_w, k_b, k_x2 = jax.random.split(key, 4)

    # Small shapes consistent with the module: batch=8, hidden width w=32.
    B, W = 8, 32
    x = jax.random.normal(k_x, (B, W), dtype=jnp.float32)
    weight = jax.random.normal(k_w, (W, W), dtype=jnp.float32) * 0.1
    bias = jax.random.normal(k_b, (W,), dtype=jnp.float32) * 0.1

    # f32 MXU-operand path: tight tolerance.
    out = jax.block_until_ready(
        resblock_forward(x, weight, bias, compute_dtype=jnp.float32))
    ref = resblock_reference(x, weight, bias)
    assert out.shape == (B, W)
    assert jnp.allclose(out, ref, atol=1e-5, rtol=1e-5), "mismatch vs reference (f32)"

    # Larger batch exercises the tiled / pipelined "parallel" grid (8 tiles of 64).
    B2 = 512
    x2 = jax.random.normal(k_x2, (B2, W), dtype=jnp.float32)
    w_prep, b_prep = prepare_resblock_params(weight, bias, compute_dtype=jnp.float32)
    out2 = jax.block_until_ready(resblock_apply(x2, w_prep, b_prep))
    ref2 = resblock_reference(x2, weight, bias)
    assert out2.shape == (B2, W)
    assert jnp.allclose(out2, ref2, atol=1e-5, rtol=1e-5), "mismatch vs reference (tiled)"

    # Default path: bf16 MXU operands, f32 accumulation/epilogue; loose tolerance.
    out_bf16 = jax.block_until_ready(resblock_forward(x2, weight, bias))
    assert jnp.allclose(out_bf16, ref2, atol=1e-1, rtol=1e-1), "mismatch vs reference (bf16)"

    print("KERNEL_OK")
</pallas_src>

<mosaic_0001>
module attributes {stable_mosaic.version = 11 : i64} {
  func.func @_resblock_kernel(%arg0: i32, %arg1: memref<8x32xf32, #tpu.memory_space<vmem>>, %arg2: memref<32x32xf32, #tpu.memory_space<vmem>>, %arg3: memref<1x32xf32, #tpu.memory_space<vmem>>, %arg4: memref<8x32xf32, #tpu.memory_space<vmem>>) attributes {dimension_semantics = [#tpu.dimension_semantics<parallel>], iteration_bounds = array<i64: 1>, scalar_prefetch = 0 : i64, scratch_operands = 0 : i64, tpu.core_type = #tpu.core_type<tc>, window_params = [{transform_indices = @transform_0, window_bounds = array<i64: 8, 32>}, {pipeline_mode = #tpu.pipeline_mode<synchronous>, transform_indices = @transform_1, window_bounds = array<i64: 32, 32>}, {pipeline_mode = #tpu.pipeline_mode<synchronous>, transform_indices = @transform_2, window_bounds = array<i64: 1, 32>}, {transform_indices = @transform_3, window_bounds = array<i64: 8, 32>}]} {
    %c0 = arith.constant 0 : index
    %c0_0 = arith.constant 0 : index
    %0 = vector.load %arg1[%c0, %c0_0] : memref<8x32xf32, #tpu.memory_space<vmem>>, vector<8x32xf32>
    %c0_1 = arith.constant 0 : index
    %c0_2 = arith.constant 0 : index
    %1 = vector.load %arg2[%c0_1, %c0_2] : memref<32x32xf32, #tpu.memory_space<vmem>>, vector<32x32xf32>
    %c0_3 = arith.constant 0 : index
    %c0_4 = arith.constant 0 : index
    %2 = vector.load %arg3[%c0_3, %c0_4] : memref<1x32xf32, #tpu.memory_space<vmem>>, vector<1x32xf32>
    %cst = arith.constant dense<0.000000e+00> : vector<8x32xf32>
    %3 = tpu.matmul %0, %1, %cst {dimension_numbers = #tpu.dot_dimension_numbers<[1], [0], [0], [1], [0, 0, 1, 1], [], []>} : vector<8x32xf32>, vector<32x32xf32>, vector<8x32xf32> -> vector<8x32xf32>
    %4 = vector.broadcast %2 : vector<1x32xf32> to vector<8x32xf32>
    %5 = arith.addf %3, %4 : vector<8x32xf32>
    %cst_5 = arith.constant 0.000000e+00 : f32
    %6 = vector.broadcast %cst_5 : f32 to vector<8x32xf32>
    %7 = arith.cmpf ogt, %5, %6 : vector<8x32xf32>
    %8 = math.exp %5 : vector<8x32xf32>
    %cst_6 = arith.constant 1.000000e+00 : f32
    %9 = vector.broadcast %cst_6 : f32 to vector<8x32xf32>
    %10 = arith.subf %8, %9 : vector<8x32xf32>
    %cst_7 = arith.constant 1.67326319 : f32
    %11 = vector.broadcast %cst_7 : f32 to vector<8x32xf32>
    %12 = arith.mulf %11, %10 : vector<8x32xf32>
    %13 = arith.select %7, %5, %12 : vector<8x32xi1>, vector<8x32xf32>
    %cst_8 = arith.constant 1.05070102 : f32
    %14 = vector.broadcast %cst_8 : f32 to vector<8x32xf32>
    %15 = arith.mulf %14, %13 : vector<8x32xf32>
    %cst_9 = arith.constant dense<0.000000e+00> : vector<8x32xf32>
    %16 = tpu.matmul %15, %1, %cst_9 {dimension_numbers = #tpu.dot_dimension_numbers<[1], [0], [0], [1], [0, 0, 1, 1], [], []>} : vector<8x32xf32>, vector<32x32xf32>, vector<8x32xf32> -> vector<8x32xf32>
    %17 = vector.broadcast %2 : vector<1x32xf32> to vector<8x32xf32>
    %18 = arith.addf %16, %17 : vector<8x32xf32>
    %19 = arith.addf %18, %0 : vector<8x32xf32>
    %cst_10 = arith.constant 0.000000e+00 : f32
    %20 = vector.broadcast %cst_10 : f32 to vector<8x32xf32>
    %21 = arith.cmpf ogt, %19, %20 : vector<8x32xf32>
    %22 = math.exp %19 : vector<8x32xf32>
    %cst_11 = arith.constant 1.000000e+00 : f32
    %23 = vector.broadcast %cst_11 : f32 to vector<8x32xf32>
    %24 = arith.subf %22, %23 : vector<8x32xf32>
    %cst_12 = arith.constant 1.67326319 : f32
    %25 = vector.broadcast %cst_12 : f32 to vector<8x32xf32>
    %26 = arith.mulf %25, %24 : vector<8x32xf32>
    %27 = arith.select %21, %19, %26 : vector<8x32xi1>, vector<8x32xf32>
    %cst_13 = arith.constant 1.05070102 : f32
    %28 = vector.broadcast %cst_13 : f32 to vector<8x32xf32>
    %29 = arith.mulf %28, %27 : vector<8x32xf32>
    %c0_14 = arith.constant 0 : index
    %c0_15 = arith.constant 0 : index
    %30 = vector.load %arg4[%c0_14, %c0_15] : memref<8x32xf32, #tpu.memory_space<vmem>>, vector<8x32xf32>
    tpu.vector_store %arg4[%c0_14, %c0_15], %29 {strides = array<i32>} : memref<8x32xf32, #tpu.memory_space<vmem>>, vector<8x32xf32>,
    return
  }
  func.func @transform_0(%arg0: i32) -> (i32, i32) {
    %c0_i32 = arith.constant 0 : i32
    %c0_i32_0 = arith.constant 0 : i32
    return %arg0, %c0_i32 : i32, i32
  }
  func.func @transform_1(%arg0: i32) -> (i32, i32) {
    %c0_i32 = arith.constant 0 : i32
    %c0_i32_0 = arith.constant 0 : i32
    %c0_i32_1 = arith.constant 0 : i32
    return %c0_i32, %c0_i32_0 : i32, i32
  }
  func.func @transform_2(%arg0: i32) -> (i32, i32) {
    %c0_i32 = arith.constant 0 : i32
    %c0_i32_0 = arith.constant 0 : i32
    %c0_i32_1 = arith.constant 0 : i32
    return %c0_i32, %c0_i32_0 : i32, i32
  }
  func.func @transform_3(%arg0: i32) -> (i32, i32) {
    %c0_i32 = arith.constant 0 : i32
    %c0_i32_0 = arith.constant 0 : i32
    return %arg0, %c0_i32 : i32, i32
  }
}

</mosaic_0001>

<llo_original>
// kernel: tpu_custom_call.1
$region0: #{tpu_custom_call.1}
  #allocation0 [shape = 'u32[]', space=smem, size = 0x4, offset = 0x4, fixed_abs, tag = 'smem constant byte address 0x4 - core index']
  #allocation1 [shape = 'u32[144,128]{1,0:T(1,128)}', space=vmem, size = 0x12000, scoped, tag = 'internal scratch']
  %s0 = inlined_call_operand.hbm [shape: f32[8,32], index: 0, kind: input, shape index: {}]
  %s1 = inlined_call_operand.hbm [shape: f32[32,32], index: 1, kind: input, shape index: {}]
  %s2 = inlined_call_operand.vmem [shape: f32[1,32], index: 2, kind: input, shape index: {}]
  %s3 = inlined_call_operand.hbm [shape: f32[8,32], index: 3, kind: output, shape index: {}]
  %s4 = sld [smem:[#allocation0]]
  $region30: #{tpu_custom_call.1} parent=0
    _
  %s6 = ssub.s32 1, %s4
  %s7 = scalar_select 0, %s6, %s4
  $region1: #{tpu_custom_call.1} parent=0
    #allocation2 [shape = 'u8[4096]{0}', space=vmem, size = 0x1000, scoped, tag = 'input window, operand 0, single buffered']
    #allocation3 [shape = 's32[1]{0}', space=sflag, size = 0x4, scoped, tag = 'scoped memory for tpu_custom_call.1']
    #allocation4 [shape = 's32[1]{0}', space=sflag, size = 0x4, scoped, tag = 'scoped memory for tpu_custom_call.1']
    #allocation5 [shape = 'u8[16384]{0}', space=vmem, size = 0x4000, scoped, tag = 'input window, operand 1, single buffered']
    #allocation6 [shape = 's32[1]{0}', space=sflag, size = 0x4, scoped, tag = 'scoped memory for tpu_custom_call.1']
    #allocation7 [shape = 'u8[4096]{0}', space=vmem, size = 0x1000, scoped, tag = 'output window, operand 0, single buffered']
    %8 = vsyncpa [#allocation3], 0
    %9 = vsyncpa [#allocation6], 0
    %10 = vsyncpa [#allocation4], 0
    // Predicated region
    $region2: #{tpu_custom_call.1} parent=1 // pred_check
      _
    $region3: #{tpu_custom_call.1} parent=1 // pred_check_branch
      %12 = sbr.rel (0) target = $region5
    $region4: #{tpu_custom_call.1} parent=1 // pred_region
      %s14 = ssub.s32 128, 128
      %15 = vsyncadd [#allocation3], %s14
      %s17 = sshll.u32 [#allocation2], 4
      %s18 = int_to_ptr.vmem [resolvable:$true] %s17
      %20 = dma.hbm_to_vmem [thread:$0]  %s0, 128, %s18, [#allocation3]
    $region5: #{tpu_custom_call.1} parent=1 // pred_fallthru
      _
    // Predicated region
    $region6: #{tpu_custom_call.1} parent=1 // pred_check
      _
    $region7: #{tpu_custom_call.1} parent=1 // pred_check_branch
      %22 = sbr.rel (0) target = $region9
    $region8: #{tpu_custom_call.1} parent=1 // pred_region
      %s24 = ssub.s32 512, 512
      %25 = vsyncadd [#allocation6], %s24
      %s26 = sshll.u32 [#allocation5], 4
      %s27 = int_to_ptr.vmem [resolvable:$true] %s26
      %32 = dma.hbm_to_vmem [thread:$0]  %s1, 512, %s27, [#allocation6], 128, 128, 8
    $region9: #{tpu_custom_call.1} parent=1 // pred_fallthru
      _
    // Predicated region
    $region10: #{tpu_custom_call.1} parent=1 // pred_check
      _
    $region11: #{tpu_custom_call.1} parent=1 // pred_check_branch
      %34 = sbr.rel (0) target = $region13
    $region12: #{tpu_custom_call.1} parent=1 // pred_region
      _
    $region13: #{tpu_custom_call.1} parent=1 // pred_fallthru
      _
    // Predicated region
    $region14: #{tpu_custom_call.1} parent=1 // pred_check
      _
    $region15: #{tpu_custom_call.1} parent=1 // pred_check_branch
      %36 = sbr.rel (0) target = $region17
    $region16: #{tpu_custom_call.1} parent=1 // pred_region
      %37 = dma.done [#allocation3], 128
    $region17: #{tpu_custom_call.1} parent=1 // pred_fallthru
      _
    // Predicated region
    $region18: #{tpu_custom_call.1} parent=1 // pred_check
      _
    $region19: #{tpu_custom_call.1} parent=1 // pred_check_branch
      %39 = sbr.rel (0) target = $region21
    $region20: #{tpu_custom_call.1} parent=1 // pred_region
      %40 = dma.done [#allocation6], 512
    $region21: #{tpu_custom_call.1} parent=1 // pred_fallthru
      _
    %v41 = vld [vmem:[#allocation2] sm:$0xff]
    %v42 = vld [vmem:[#allocation5] sm:$0xff]
    %v43 = vld [vmem:[#allocation5 + $0x8] sm:$0xff]
    %v44 = vld [vmem:[#allocation5 + $0x10] sm:$0xff]
    %v45 = vld [vmem:[#allocation5 + $0x18] sm:$0xff]
    %v46 = vld [vmem:[%s2] sm:$0x1]
    %v48 = vlaneseq
    %v49 = vshrl.u32 %v48, 7
    %v50 = vsub.s32 0, %v49
    %v51 = vrot.slane %v46, %v50
    %vm53 = vcmask 261120
    %v55 = vsel %vm53, %v41, 0
    %57 = vmatprep.subr.mxu0 0.0
    %58 = vmatpush1.msra.mxu0 %v42
    %59 = vmatprep.subr.mxu0 0.0
    %60 = vmatpush1.msra.mxu0 %v43
    %61 = vmatprep.subr.mxu0 0.0
    %62 = vmatpush1.msra.mxu0 %v44
    %63 = vmatprep.subr.mxu0 0.0
    %64 = vmatpush1.msra.mxu0 %v45
    %65 = vmatprep.subr.mxu0 0.0
    %66 = vmatpush1.msra.mxu0 0.0
    %67 = vmatprep.subr.mxu0 0.0
    %68 = vmatpush1.msra.mxu0 0.0
    %69 = vmatprep.subr.mxu0 0.0
    %70 = vmatpush1.msra.mxu0 0.0
    %71 = vmatprep.subr.mxu0 0.0
    %72 = vmatpush1.msra.mxu0 0.0
    %73 = vmatprep.subr.mxu0 0.0
    %74 = vmatpush1.msra.mxu0 0.0
    %75 = vmatprep.subr.mxu0 0.0
    %76 = vmatpush1.msra.mxu0 0.0
    %77 = vmatprep.subr.mxu0 0.0
    %78 = vmatpush1.msra.mxu0 0.0
    %79 = vmatprep.subr.mxu0 0.0
    %80 = vmatpush1.msra.mxu0 0.0
    %81 = vmatprep.subr.mxu0 0.0
    %82 = vmatpush1.msra.mxu0 0.0
    %83 = vmatprep.subr.mxu0 0.0
    %84 = vmatpush1.msra.mxu0 0.0
    %85 = vmatprep.subr.mxu0 0.0
    %86 = vmatpush1.msra.mxu0 0.0
    %87 = vmatprep.subr.mxu0 0.0
    %88 = vmatpush1.msra.mxu0 0.0
    %89 = vmatprep.subr.mxu0 0.0
    %90 = vmatpush1.msra.mxu0 0.0
    %91 = vmatprep.subr.mxu0 0.0
    %92 = vmatpush1.msra.mxu0 0.0
    %93 = vmatprep.subr.mxu0 0.0
    %94 = vmatpush1.msra.mxu0 0.0
    %95 = vmatprep.subr.mxu0 0.0
    %96 = vmatpush1.msra.mxu0 0.0
    %97 = vmatprep.subr.mxu0 0.0
    %98 = vmatpush1.msra.mxu0 0.0
    %99 = vmatprep.subr.mxu0 0.0
    %100 = vmatpush1.msra.mxu0 0.0
    %101 = vmatprep.subr.mxu0 0.0
    %102 = vmatpush1.msra.mxu0 0.0
    %103 = vmatprep.subr.mxu0 0.0
    %104 = vmatpush1.msra.mxu0 0.0
    %105 = vmatprep.subr.mxu0 0.0
    %106 = vmatpush1.msra.mxu0 0.0
    %107 = vmatprep.subr.mxu0 0.0
    %108 = vmatpush1.msra.mxu0 0.0
    %109 = vmatprep.subr.mxu0 0.0
    %110 = vmatpush1.msra.mxu0 0.0
    %111 = vmatprep.subr.mxu0 0.0
    %112 = vmatpush1.msra.mxu0 0.0
    %113 = vmatprep.subr.mxu0 0.0
    %114 = vmatpush1.msra.mxu0 0.0
    %115 = vmatprep.subr.mxu0 0.0
    %116 = vmatpush1.msra.mxu0 0.0
    %117 = vmatprep.subr.mxu0 0.0
    %118 = vmatpush1.msra.mxu0 0.0
    %119 = vmatprep.subr.mxu0 0.0
    %120 = vmatpush1.msra.mxu0 0.0
    %121 = vmatprep.mubr.f32.mxu0 0.0
    %122 = vmatmul.mubr.f32.gmra.mrb[0].mxu0 %v55
    %v123 = vpop.f32.mrb[0].mxu0
    %v124 = vadd.f32 %v51, %v123
    %v125 = vpop.f32.mrb[0].mxu0
    %126 = vdwg.mxu0
    %vm127 = vcmp.gt.f32.partialorder %v124, 0.0
    %v128 = vmul.f32 %v124, 1.442695
    %v129 = vpow.pop %v128
    %v130 = vsub.f32 %v129, 1.0
    %v131 = vmul.f32 %v130, 1.6732632
    %v132 = vsel %vm127, %v124, %v131
    %v133 = vmul.f32 %v132, 1.050701
    %v135 = vsel %vm53, %v133, 0
    %137 = vmatprep.subr.mxu0 0.0
    %138 = vmatpush1.msra.mxu0 %v42
    %139 = vmatprep.subr.mxu0 0.0
    %140 = vmatpush1.msra.mxu0 %v43
    %141 = vmatprep.subr.mxu0 0.0
    %142 = vmatpush1.msra.mxu0 %v44
    %143 = vmatprep.subr.mxu0 0.0
    %144 = vmatpush1.msra.mxu0 %v45
    %145 = vmatprep.subr.mxu0 0.0
    %146 = vmatpush1.msra.mxu0 0.0
    %147 = vmatprep.subr.mxu0 0.0
    %148 = vmatpush1.msra.mxu0 0.0
    %149 = vmatprep.subr.mxu0 0.0
    %150 = vmatpush1.msra.mxu0 0.0
    %151 = vmatprep.subr.mxu0 0.0
    %152 = vmatpush1.msra.mxu0 0.0
    %153 = vmatprep.subr.mxu0 0.0
    %154 = vmatpush1.msra.mxu0 0.0
    %155 = vmatprep.subr.mxu0 0.0
    %156 = vmatpush1.msra.mxu0 0.0
    %157 = vmatprep.subr.mxu0 0.0
    %158 = vmatpush1.msra.mxu0 0.0
    %159 = vmatprep.subr.mxu0 0.0
    %160 = vmatpush1.msra.mxu0 0.0
    %161 = vmatprep.subr.mxu0 0.0
    %162 = vmatpush1.msra.mxu0 0.0
    %163 = vmatprep.subr.mxu0 0.0
    %164 = vmatpush1.msra.mxu0 0.0
    %165 = vmatprep.subr.mxu0 0.0
    %166 = vmatpush1.msra.mxu0 0.0
    %167 = vmatprep.subr.mxu0 0.0
    %168 = vmatpush1.msra.mxu0 0.0
    %169 = vmatprep.subr.mxu0 0.0
    %170 = vmatpush1.msra.mxu0 0.0
    %171 = vmatprep.subr.mxu0 0.0
    %172 = vmatpush1.msra.mxu0 0.0
    %173 = vmatprep.subr.mxu0 0.0
    %174 = vmatpush1.msra.mxu0 0.0
    %175 = vmatprep.subr.mxu0 0.0
    %176 = vmatpush1.msra.mxu0 0.0
    %177 = vmatprep.subr.mxu0 0.0
    %178 = vmatpush1.msra.mxu0 0.0
    %179 = vmatprep.subr.mxu0 0.0
    %180 = vmatpush1.msra.mxu0 0.0
    %181 = vmatprep.subr.mxu0 0.0
    %182 = vmatpush1.msra.mxu0 0.0
    %183 = vmatprep.subr.mxu0 0.0
    %184 = vmatpush1.msra.mxu0 0.0
    %185 = vmatprep.subr.mxu0 0.0
    %186 = vmatpush1.msra.mxu0 0.0
    %187 = vmatprep.subr.mxu0 0.0
    %188 = vmatpush1.msra.mxu0 0.0
    %189 = vmatprep.subr.mxu0 0.0
    %190 = vmatpush1.msra.mxu0 0.0
    %191 = vmatprep.subr.mxu0 0.0
    %192 = vmatpush1.msra.mxu0 0.0
    %193 = vmatprep.subr.mxu0 0.0
    %194 = vmatpush1.msra.mxu0 0.0
    %195 = vmatprep.subr.mxu0 0.0
    %196 = vmatpush1.msra.mxu0 0.0
    %197 = vmatprep.subr.mxu0 0.0
    %198 = vmatpush1.msra.mxu0 0.0
    %199 = vmatprep.subr.mxu0 0.0
    %200 = vmatpush1.msra.mxu0 0.0
    %201 = vmatprep.mubr.f32.mxu0 0.0
    %202 = vmatmul.mubr.f32.gmra.mrb[0].mxu0 %v135
    %v203 = vpop.f32.mrb[0].mxu0
    %v204 = vadd.f32 %v51, %v203
    %v205 = vpop.f32.mrb[0].mxu0
    %206 = vdwg.mxu0
    %v207 = vadd.f32 %v204, %v41
    %vm208 = vcmp.gt.f32.partialorder %v207, 0.0
    %v209 = vmul.f32 %v207, 1.442695
    %v210 = vpow.pop %v209
    %v211 = vsub.f32 %v210, 1.0
    %v212 = vmul.f32 %v211, 1.6732632
    %v213 = vsel %vm208, %v207, %v212
    %v214 = vmul.f32 %v213, 1.050701
    %215 = vst.msk [vmem:[#allocation7] sm:$0xff] %vm53, %v214
    // Predicated region
    $region22: #{tpu_custom_call.1} parent=1 // pred_check
      _
    $region23: #{tpu_custom_call.1} parent=1 // pred_check_branch
      %217 = sbr.rel (0) target = $region25
    $region24: #{tpu_custom_call.1} parent=1 // pred_region
      %s219 = ssub.s32 128, 128
      %220 = vsyncadd [#allocation4], %s219
      %s222 = sshll.u32 [#allocation7], 4
      %s223 = int_to_ptr.vmem [resolvable:$true] %s222
      %225 = dma.vmem_to_hbm [thread:$0]  %s223, 128, %s3, [#allocation4]
    $region25: #{tpu_custom_call.1} parent=1 // pred_fallthru
      _
    // Predicated region
    $region26: #{tpu_custom_call.1} parent=1 // pred_check
      _
    $region27: #{tpu_custom_call.1} parent=1 // pred_check_branch
      %227 = sbr.rel (0) target = $region29
    $region28: #{tpu_custom_call.1} parent=1 // pred_region
      %228 = dma.done [#allocation4], 128
    $region29: #{tpu_custom_call.1} parent=1 // pred_fallthru
      _
    %229 = vsyncpa [#allocation3], 1
    %230 = vsyncpa [#allocation6], 1
    %231 = vsyncpa [#allocation4], 1

</llo_original>
